<compile_context>
chip_gen: v7x
topology: tpu7x:2x2x1
jax: 0.10.0
libtpu: 0.0.40
codegen_flags: <defaults>
</compile_context>

<pallas_src>
import jax
import jax.numpy as jnp
from jax.experimental import pallas as pl
from jax.experimental.pallas import tpu as pltpu

LANE = 128          # hardware lane width
MAX_ROWS = 2048     # sublane rows per block -> up to ~4 MiB f32 payload per step
MAX_FLAT = 131072   # lane tile for the fallback (channel-flat) layout (~2 MiB/step)


def _round_up(v, m):
    return ((v + m - 1) // m) * m


def _dsconv_kernel_tiled(p_ref, x_ref, o_ref):
    """Main path. p_ref: SMEM (4,) f32 = [a0, a1, a2, b];
    x_ref: (TB_N, 3, TR, 128); o_ref: (TB_N, TR, 128)."""
    x = x_ref[...]
    # folded depthwise + pointwise conv (avg_pool3d(k=1) is identity)
    z = x[:, 0] * p_ref[0] + x[:, 1] * p_ref[1] + x[:, 2] * p_ref[2] + p_ref[3]
    # softmax over the size-1 channel axis == 1.0 for finite z; NaN/+-Inf
    # propagate to NaN exactly like PyTorch's softmax on a singleton axis.
    o_ref[...] = ((z - z) + 1.0).astype(o_ref.dtype)


def _dsconv_kernel_flat(p_ref, x_ref, o_ref):
    """Fallback when D*H*W is not a multiple of 128.
    x_ref: (3, TL); o_ref: (1, TL)."""
    x = x_ref[...]
    z = x[0:1, :] * p_ref[0] + x[1:2, :] * p_ref[1] + x[2:3, :] * p_ref[2] + p_ref[3]
    o_ref[...] = ((z - z) + 1.0).astype(o_ref.dtype)


def depthwise_separable_conv3d(x, w_dw, b_dw, w_pw, b_pw):
    """x: (N, 3, D, H, W) NCDHW, like PyTorch Conv3d. Returns (N, 1, D, H, W)."""
    N, C, D, H, W = x.shape
    assert C == 3
    M = D * H * W
    out_dtype = x.dtype
    itemsize = jnp.dtype(out_dtype).itemsize

    # Fold depthwise (per-channel scale+bias) and pointwise (channel reduce+bias)
    # into a single affine over channels: z = sum_c a[c]*x[:,c] + b.
    wd = w_dw.reshape(3).astype(jnp.float32)
    bd = b_dw.reshape(3).astype(jnp.float32)
    wp = w_pw.reshape(3).astype(jnp.float32)
    bp = b_pw.reshape(()).astype(jnp.float32)
    a = wd * wp
    b = jnp.sum(bd * wp) + bp
    params = jnp.concatenate([a, b.reshape(1)])  # (4,) f32, lives in SMEM

    smem_spec = pl.BlockSpec(memory_space=pltpu.MemorySpace.SMEM)
    cparams = pltpu.CompilerParams(
        dimension_semantics=("parallel", "parallel"))
    # ~8 flops/elem (3 mul + 3 add + sub + add), 4 values of HBM traffic/elem.
    cost = pl.CostEstimate(flops=8 * N * M,
                           transcendentals=0,
                           bytes_accessed=4 * N * M * itemsize)

    if M % LANE == 0:
        # High-performance path: free reshape to (N, 3, R, 128); full 8x128 vregs.
        R = M // LANE
        TR = min(R, MAX_ROWS)                      # multiple of 8, or == R
        # Block the batch axis too when R is small so per-step payload stays
        # in the 2-4 MiB range.
        TB_N = 1
        if R < MAX_ROWS and N > 1:
            TB_N = min(N, max(1, MAX_ROWS // R))
        # Guarantee >= 2 grid steps when possible (megacore split + pipelining).
        if pl.cdiv(N, TB_N) * pl.cdiv(R, TR) < 2:
            if TB_N > 1:
                TB_N = max(1, (TB_N + 1) // 2)
            elif TR > 8:
                TR = max(8, _round_up((TR + 1) // 2, 8))

        x4 = x.reshape(N, 3, R, LANE)              # free reshape, no HBM transpose
        grid = (pl.cdiv(N, TB_N), pl.cdiv(R, TR))
        out = pl.pallas_call(
            _dsconv_kernel_tiled,
            out_shape=jax.ShapeDtypeStruct((N, R, LANE), out_dtype),
            grid_spec=pltpu.PrefetchScalarGridSpec(
                num_scalar_prefetch=0,
                grid=grid,
                in_specs=[
                    smem_spec,                                              # folded affine params
                    pl.BlockSpec((TB_N, 3, TR, LANE), lambda n, r: (n, 0, r, 0)),
                ],
                out_specs=pl.BlockSpec((TB_N, TR, LANE), lambda n, r: (n, r, 0)),
            ),
            compiler_params=cparams,
            cost_estimate=cost,
        )(params, x4)
        return out.reshape(N, 1, D, H, W)

    # Fallback path: channel-flat layout (N, 3, DHW) with large lane tiles.
    # TODO(synk): for very large non-128-aligned tensors, routing the bulk
    # floor(M/128)*128 elements through the tiled path would be denser still.
    TL = min(M, MAX_FLAT)                          # == M, or a multiple of 128
    if N == 1 and M > LANE:
        # Split the flat axis so the grid has >= 2 steps even for batch 1.
        half = min(TL, _round_up((M + 1) // 2, LANE))
        if half < M:
            TL = half
    x3 = x.reshape(N, 3, M)
    grid = (N, pl.cdiv(M, TL))
    out = pl.pallas_call(
        _dsconv_kernel_flat,
        out_shape=jax.ShapeDtypeStruct((N, 1, M), out_dtype),
        grid_spec=pltpu.PrefetchScalarGridSpec(
            num_scalar_prefetch=0,
            grid=grid,
            in_specs=[
                smem_spec,
                pl.BlockSpec((None, 3, TL), lambda n, m: (n, 0, m)),
            ],
            out_specs=pl.BlockSpec((None, 1, TL), lambda n, m: (n, 0, m)),
        ),
        compiler_params=cparams,
        cost_estimate=cost,
    )(params, x3)
    return out.reshape(N, 1, D, H, W)


def reference(x, w_dw, b_dw, w_pw, b_pw):
    # Pure-JAX reference matching the PyTorch forward (unfused, for validation).
    y = x * w_dw.reshape(1, 3, 1, 1, 1) + b_dw.reshape(1, 3, 1, 1, 1)
    z = jnp.sum(y * w_pw.reshape(1, 3, 1, 1, 1), axis=1, keepdims=True) \
        + b_pw.reshape(1, 1, 1, 1, 1)
    return jax.nn.softmax(z, axis=1)


if __name__ == "__main__":
    key = jax.random.PRNGKey(0)
    kx, k1, k2, k3, k4, kx2 = jax.random.split(key, 6)

    # Conv3d parameter shapes: depthwise (3,1,1,1,1)+(3,), pointwise (1,3,1,1,1)+(1,)
    w_dw = jax.random.normal(k1, (3,), dtype=jnp.float32)
    b_dw = jax.random.normal(k2, (3,), dtype=jnp.float32)
    w_pw = jax.random.normal(k3, (3,), dtype=jnp.float32)
    b_pw = jax.random.normal(k4, (1,), dtype=jnp.float32)

    # --- main path (D*H*W multiple of 128): N=2, C=3, D=4, H=8, W=8 ---
    x = jax.random.normal(kx, (2, 3, 4, 8, 8), dtype=jnp.float32)
    out = jax.block_until_ready(depthwise_separable_conv3d(x, w_dw, b_dw, w_pw, b_pw))
    ref = reference(x, w_dw, b_dw, w_pw, b_pw)
    assert out.shape == (2, 1, 4, 8, 8), out.shape
    assert jnp.allclose(out, ref, atol=1e-5), "mismatch vs reference (tiled path)"
    assert jnp.allclose(out, 1.0, atol=1e-6)   # softmax over a singleton axis is 1.0

    # --- fallback path (D*H*W not a multiple of 128): N=2, C=3, D=3, H=5, W=5 ---
    x2 = jax.random.normal(kx2, (2, 3, 3, 5, 5), dtype=jnp.float32)
    out2 = jax.block_until_ready(depthwise_separable_conv3d(x2, w_dw, b_dw, w_pw, b_pw))
    ref2 = reference(x2, w_dw, b_dw, w_pw, b_pw)
    assert out2.shape == (2, 1, 3, 5, 5), out2.shape
    assert jnp.allclose(out2, ref2, atol=1e-5), "mismatch vs reference (flat path)"

    print("KERNEL_OK")
</pallas_src>

<mosaic_0001>
module attributes {stable_mosaic.version = 11 : i64} {
  func.func @_dsconv_kernel_tiled(%arg0: i32, %arg1: i32, %arg2: memref<4xf32, #tpu.memory_space<smem>>, %arg3: memref<1x3x2x128xf32, #tpu.memory_space<vmem>>, %arg4: memref<1x2x128xf32, #tpu.memory_space<vmem>>) attributes {dimension_semantics = [#tpu.dimension_semantics<parallel>, #tpu.dimension_semantics<parallel>], iteration_bounds = array<i64: 2, 1>, scalar_prefetch = 0 : i64, scratch_operands = 0 : i64, tpu.core_type = #tpu.core_type<tc>, window_params = [{transform_indices = @transform_0, window_bounds = array<i64: 4>}, {transform_indices = @transform_1, window_bounds = array<i64: 1, 3, 2, 128>}, {transform_indices = @transform_2, window_bounds = array<i64: 1, 2, 128>}]} {
    %c0 = arith.constant 0 : index
    %c0_0 = arith.constant 0 : index
    %c0_1 = arith.constant 0 : index
    %c0_2 = arith.constant 0 : index
    %0 = vector.load %arg3[%c0, %c0_0, %c0_1, %c0_2] : memref<1x3x2x128xf32, #tpu.memory_space<vmem>>, vector<1x3x2x128xf32>
    %1 = vector.extract_strided_slice %0 {offsets = [0, 0, 0, 0], sizes = [1, 1, 2, 128], strides = [1, 1, 1, 1]} : vector<1x3x2x128xf32> to vector<1x1x2x128xf32>
    %2 = vector.shape_cast %1 : vector<1x1x2x128xf32> to vector<1x2x128xf32>
    %c0_3 = arith.constant 0 : index
    %3 = memref.load %arg2[%c0_3] : memref<4xf32, #tpu.memory_space<smem>>
    %4 = vector.broadcast %3 : f32 to vector<1x2x128xf32>
    %5 = arith.mulf %2, %4 : vector<1x2x128xf32>
    %6 = vector.extract_strided_slice %0 {offsets = [0, 1, 0, 0], sizes = [1, 1, 2, 128], strides = [1, 1, 1, 1]} : vector<1x3x2x128xf32> to vector<1x1x2x128xf32>
    %7 = vector.shape_cast %6 : vector<1x1x2x128xf32> to vector<1x2x128xf32>
    %c1 = arith.constant 1 : index
    %8 = memref.load %arg2[%c1] : memref<4xf32, #tpu.memory_space<smem>>
    %9 = vector.broadcast %8 : f32 to vector<1x2x128xf32>
    %10 = arith.mulf %7, %9 : vector<1x2x128xf32>
    %11 = arith.addf %5, %10 : vector<1x2x128xf32>
    %12 = vector.extract_strided_slice %0 {offsets = [0, 2, 0, 0], sizes = [1, 1, 2, 128], strides = [1, 1, 1, 1]} : vector<1x3x2x128xf32> to vector<1x1x2x128xf32>
    %13 = vector.shape_cast %12 : vector<1x1x2x128xf32> to vector<1x2x128xf32>
    %c2 = arith.constant 2 : index
    %14 = memref.load %arg2[%c2] : memref<4xf32, #tpu.memory_space<smem>>
    %15 = vector.broadcast %14 : f32 to vector<1x2x128xf32>
    %16 = arith.mulf %13, %15 : vector<1x2x128xf32>
    %17 = arith.addf %11, %16 : vector<1x2x128xf32>
    %c3 = arith.constant 3 : index
    %18 = memref.load %arg2[%c3] : memref<4xf32, #tpu.memory_space<smem>>
    %19 = vector.broadcast %18 : f32 to vector<1x2x128xf32>
    %20 = arith.addf %17, %19 : vector<1x2x128xf32>
    %21 = arith.subf %20, %20 : vector<1x2x128xf32>
    %cst = arith.constant 1.000000e+00 : f32
    %22 = vector.broadcast %cst : f32 to vector<1x2x128xf32>
    %23 = arith.addf %21, %22 : vector<1x2x128xf32>
    %c0_4 = arith.constant 0 : index
    %c0_5 = arith.constant 0 : index
    %c0_6 = arith.constant 0 : index
    %24 = vector.load %arg4[%c0_4, %c0_5, %c0_6] : memref<1x2x128xf32, #tpu.memory_space<vmem>>, vector<1x2x128xf32>
    tpu.vector_store %arg4[%c0_4, %c0_5, %c0_6], %23 {strides = array<i32>} : memref<1x2x128xf32, #tpu.memory_space<vmem>>, vector<1x2x128xf32>,
    return
  }
  func.func @transform_0(%arg0: i32, %arg1: i32) -> i32 {
    %c0_i32 = arith.constant 0 : i32
    %c0_i32_0 = arith.constant 0 : i32
    return %c0_i32 : i32
  }
  func.func @transform_1(%arg0: i32, %arg1: i32) -> (i32, i32, i32, i32) {
    %c0_i32 = arith.constant 0 : i32
    %c0_i32_0 = arith.constant 0 : i32
    %c0_i32_1 = arith.constant 0 : i32
    return %arg0, %c0_i32, %arg1, %c0_i32_0 : i32, i32, i32, i32
  }
  func.func @transform_2(%arg0: i32, %arg1: i32) -> (i32, i32, i32) {
    %c0_i32 = arith.constant 0 : i32
    %c0_i32_0 = arith.constant 0 : i32
    return %arg0, %arg1, %c0_i32 : i32, i32, i32
  }
}

</mosaic_0001>

<llo_original>
// kernel: tpu_custom_call.1
$region0: #{tpu_custom_call.1}
  #allocation0 [shape = 'u32[]', space=smem, size = 0x4, offset = 0x4, fixed_abs, tag = 'smem constant byte address 0x4 - core index']
  #allocation1 [shape = 'u32[144,128]{1,0:T(1,128)}', space=vmem, size = 0x12000, scoped, tag = 'internal scratch']
  %s0 = inlined_call_operand.hbm [shape: f32[4], index: 0, kind: input, shape index: {}]
  %s1 = inlined_call_operand.hbm [shape: f32[2,3,2,128], index: 1, kind: input, shape index: {}]
  %s2 = inlined_call_operand.hbm [shape: f32[2,2,128], index: 2, kind: output, shape index: {}]
  %s3 = sld [smem:[#allocation0]]
  $region49: #{tpu_custom_call.1} parent=0
    _
  %s5 = ssub.s32 1, %s3
  %s6 = scalar_select 0, %s5, %s3
  $region1: #{tpu_custom_call.1} parent=0
    #allocation2 [shape = 'u8[512]{0}', space=smem, size = 0x200, scoped, tag = 'input window, operand 0, single buffered']
    #allocation3 [shape = 's32[2]{0}', space=sflag, size = 0x8, scoped, tag = 'scoped memory for tpu_custom_call.1']
    #allocation4 [shape = 's32[2]{0}', space=sflag, size = 0x8, scoped, tag = 'scoped memory for tpu_custom_call.1']
    #allocation5 [shape = 's32[2]{0}', space=sflag, size = 0x8, scoped, tag = 'scoped memory for tpu_custom_call.1']
    #allocation6 [shape = 'u8[6144]{0}', space=vmem, size = 0x1800, scoped, tag = 'input window, operand 1']
    #allocation7 [shape = 'u8[2048]{0}', space=vmem, size = 0x800, scoped, tag = 'output window, operand 0']
    %7 = vsyncpa [#allocation5], 0
    %8 = vsyncpa [#allocation3], 0
    %s9 = scalar_lea.sflag [#allocation3], 1
    %10 = vsyncpa %s9, 0
    %11 = vsyncpa [#allocation4], 0
    %s12 = scalar_lea.sflag [#allocation4], 1
    %13 = vsyncpa %s12, 0
    loop: start=0, step=1, limit=4
    $region2: #{tpu_custom_call.1} parent=1 // loop_pre_header
      _
    $region3: #{tpu_custom_call.1} parent=1 // loop_header
      %s15 = sphi 0, %s19
      %p16 = scmp.ge.s32.totalorder %s15, 4
      %s22 = sphi 0, %s34
      %s23 = sphi 0, %s30
      %s24 = sphi 0, %s22
      %s25 = sphi 0, %s23
      %s26 = sphi 0, %s24
      %s27 = sphi 0, %s25
      %s35 = sphi 0, %s35
      %s37 = sphi 0, %s35
      %s38 = sphi 0, %s37
      %s52 = sphi 0, %s38
      %s60 = sphi 0, %s62
      %s63 = sphi 0, %s60
      %s64 = sphi 0, %s63
      %s80 = sphi 0, %s64
      %s88 = sphi 0, %s90
      %s91 = sphi 0, %s88
      %s92 = sphi 0, %s91
      %s108 = sphi 0, %s92
    $region4: #{tpu_custom_call.1} parent=1 // loop_header_branch
      %18 = sbr.rel (%p16) target = $region8
    $region5: #{tpu_custom_call.1} parent=1 // loop_body
      %s20 = ssub.s32 %s15, 1
      %s21 = ssub.s32 %s15, 2
      %s28 = sadd.s32 1, %s23
      %p29 = scmp.ge.s32.totalorder %s28, 1
      %s30 = scalar_select %p29, 0, %s28
      %s31 = sadd.s32 1, %s22
      %s32 = scalar_select %p29, %s31, %s22
      %p33 = scmp.ge.s32.totalorder %s32, 2
      %s34 = scalar_select %p33, 0, %s32
      %s36 = sadd.s32 %s35, 1
      %p39 = scmp.eq.s32.totalorder %s15, 1
      %p40 = scmp.ne.s32.totalorder %s35, %s37
      %p41 = scmp.eq.s32.totalorder %s15, 0
      %p42 = por %p40, %p41
      %p43 = scmp.ne.s32.totalorder %s35, %s37
      %p44 = scmp.eq.s32.totalorder %s20, 1
      %p45 = por %p43, %p44
      %p46 = scmp.ne.s32.totalorder %s37, %s38
      %p47 = scmp.eq.s32.totalorder %s20, 0
      %p48 = por %p46, %p47
      %p49 = scmp.ne.s32.totalorder %s37, %s38
      %p50 = scmp.eq.s32.totalorder %s21, 1
      %p51 = por %p49, %p50
      %p53 = scmp.ne.s32.totalorder %s38, %s52
      %p54 = scmp.eq.s32.totalorder %s21, 0
      %p55 = por %p53, %p54
      %s56 = ssub.s32 %s22, %s34
      %s57 = ssub.s32 %s23, %s30
      %s58 = sor.u32 %s56, %s57
      %p59 = scmp.eq.s32.totalorder %s58, 0
      %s61 = sadd.s32 %s60, 1
      %s62 = scalar_select %p59, %s60, %s61
      %p65 = pneg %p59
      %p66 = scmp.eq.s32.totalorder %s15, 1
      %p67 = por %p65, %p66
      %p68 = scmp.ne.s32.totalorder %s60, %s63
      %p69 = scmp.eq.s32.totalorder %s15, 0
      %p70 = por %p68, %p69
      %p71 = scmp.ne.s32.totalorder %s60, %s63
      %p72 = scmp.eq.s32.totalorder %s20, 1
      %p73 = por %p71, %p72
      %p74 = scmp.ne.s32.totalorder %s63, %s64
      %p75 = scmp.eq.s32.totalorder %s20, 0
      %p76 = por %p74, %p75
      %p77 = scmp.ne.s32.totalorder %s63, %s64
      %p78 = scmp.eq.s32.totalorder %s21, 1
      %p79 = por %p77, %p78
      %p81 = scmp.ne.s32.totalorder %s64, %s80
      %p82 = scmp.eq.s32.totalorder %s21, 0
      %p83 = por %p81, %p82
      %s84 = ssub.s32 %s22, %s34
      %s85 = ssub.s32 %s23, %s30
      %s86 = sor.u32 %s84, %s85
      %p87 = scmp.eq.s32.totalorder %s86, 0
      %s89 = sadd.s32 %s88, 1
      %s90 = scalar_select %p87, %s88, %s89
      %p93 = pneg %p87
      %p94 = scmp.eq.s32.totalorder %s15, 1
      %p95 = por %p93, %p94
      %p96 = scmp.ne.s32.totalorder %s88, %s91
      %p97 = scmp.eq.s32.totalorder %s15, 0
      %p98 = por %p96, %p97
      %p99 = scmp.ne.s32.totalorder %s88, %s91
      %p100 = scmp.eq.s32.totalorder %s20, 1
      %p101 = por %p99, %p100
      %p102 = scmp.ne.s32.totalorder %s91, %s92
      %p103 = scmp.eq.s32.totalorder %s20, 0
      %p104 = por %p102, %p103
      %p105 = scmp.ne.s32.totalorder %s91, %s92
      %p106 = scmp.eq.s32.totalorder %s21, 1
      %p107 = por %p105, %p106
      %p109 = scmp.ne.s32.totalorder %s92, %s108
      %p110 = scmp.eq.s32.totalorder %s21, 0
      %p111 = por %p109, %p110
      %p112 = scmp.le.s32.totalorder 1, %s15
      %p113 = scmp.lt.s32.totalorder %s15, 3
      %p114 = pnand %p112, %p113
      %p115 = pneg %p114
      // Predicated region
      $region9: #{tpu_custom_call.1} parent=5 // pred_check
        _
      $region10: #{tpu_custom_call.1} parent=5 // pred_check_branch
        %117 = sbr.rel (%p114) target = $region12
      $region11: #{tpu_custom_call.1} parent=5 // pred_region
        %s118 = ssub.s32 %s15, 1
        // Predicated region
        $region13: #{tpu_custom_call.1} parent=11 // pred_check
          %p119 = pneg %p48
        $region14: #{tpu_custom_call.1} parent=11 // pred_check_branch
          %121 = sbr.rel (%p119) target = $region16
        $region15: #{tpu_custom_call.1} parent=11 // pred_region
          %s123 = ssub.s32 16, 16
          %124 = vsyncadd [#allocation5], %s123
          %127 = dma.hbm_to_smem %s0, 16, [#allocation2], [#allocation5]
        $region16: #{tpu_custom_call.1} parent=11 // pred_fallthru
          _
      $region12: #{tpu_custom_call.1} parent=5 // pred_fallthru
        _
      %p128 = scmp.lt.s32.totalorder %s15, 2
      // Predicated region
      $region17: #{tpu_custom_call.1} parent=5 // pred_check
        %p129 = pneg %p128
      $region18: #{tpu_custom_call.1} parent=5 // pred_check_branch
        %131 = sbr.rel (%p129) target = $region20
      $region19: #{tpu_custom_call.1} parent=5 // pred_region
        // Predicated region
        $region21: #{tpu_custom_call.1} parent=19 // pred_check
          %p132 = pneg %p70
        $region22: #{tpu_custom_call.1} parent=19 // pred_check_branch
          %134 = sbr.rel (%p132) target = $region24
        $region23: #{tpu_custom_call.1} parent=19 // pred_region
          %s135 = sand.u32 %s60, 1
          %s136 = scalar_lea.sflag [#allocation3], %s135
          %s137 = sand.u32 %s60, 1
          %s138 = smul.addr %s137, 6
          %s139 = scalar_lea.vmem [#allocation6], %s138
          %s141 = ssub.s32 96, 96
          %142 = vsyncadd %s136, %s141
          %s143 = smul.addr %s22, 3
          %s144 = sadd.s32 %s23, %s143
          %s145 = smul.addr %s144, 32
          %s146 = scalar_lea.hbm %s1, %s145
          %s147 = sshll.u32 %s139, 4
          %s148 = int_to_ptr.vmem [resolvable:$true] %s147
          %153 = dma.hbm_to_vmem [thread:$0]  %s146, 96, %s148, %s136, 32, 32, 2
        $region24: #{tpu_custom_call.1} parent=19 // pred_fallthru
          _
      $region20: #{tpu_custom_call.1} parent=5 // pred_fallthru
        _
      %p154 = scmp.le.s32.totalorder 1, %s15
      %p155 = scmp.lt.s32.totalorder %s15, 3
      %p156 = pnand %p154, %p155
      %p157 = pneg %p156
      // Predicated region
      $region25: #{tpu_custom_call.1} parent=5 // pred_check
        _
      $region26: #{tpu_custom_call.1} parent=5 // pred_check_branch
        %159 = sbr.rel (%p156) target = $region28
      $region27: #{tpu_custom_call.1} parent=5 // pred_region
        %s160 = ssub.s32 %s15, 1
        // Predicated region
        $region29: #{tpu_custom_call.1} parent=27 // pred_check
          %p161 = pneg %p48
        $region30: #{tpu_custom_call.1} parent=27 // pred_check_branch
          %163 = sbr.rel (%p161) target = $region32
        $region31: #{tpu_custom_call.1} parent=27 // pred_region
          %164 = dma.done [#allocation5], 16
        $region32: #{tpu_custom_call.1} parent=27 // pred_fallthru
          _
        %s165 = sand.u32 %s63, 1
        %s166 = scalar_lea.sflag [#allocation3], %s165
        %s167 = sand.u32 %s63, 1
        %s168 = smul.addr %s167, 6
        %s169 = scalar_lea.vmem [#allocation6], %s168
        // Predicated region
        $region33: #{tpu_custom_call.1} parent=27 // pred_check
          %p170 = pneg %p76
        $region34: #{tpu_custom_call.1} parent=27 // pred_check_branch
          %172 = sbr.rel (%p170) target = $region36
        $region35: #{tpu_custom_call.1} parent=27 // pred_region
          %173 = dma.done %s166, 96
        $region36: #{tpu_custom_call.1} parent=27 // pred_fallthru
          _
        %174 = sfence
        %p175 = pneg %p48
        %p176 = pneg %p45
        %s177 = sand.u32 %s63, 1
        %s178 = scalar_lea.sflag [#allocation3], %s177
        %s179 = sand.u32 %s63, 1
        %s180 = smul.addr %s179, 6
        %s181 = scalar_lea.vmem [#allocation6], %s180
        %p182 = pneg %p76
        %p183 = pneg %p73
        %p184 = pneg %p104
        %p185 = pneg %p101
        %s186 = sand.u32 %s91, 1
        %s187 = scalar_lea.sflag [#allocation4], %s186
        %s188 = sand.u32 %s91, 1
        %s189 = smul.addr %s188, 2
        %s190 = scalar_lea.vmem [#allocation7], %s189
        %v191 = vld [vmem:[%s169] sm:$0x3]
        %v192 = vld [vmem:[%s169 + $0x2] sm:$0x3]
        %v193 = vld [vmem:[%s169 + $0x4] sm:$0x3]
        %s194 = sld [smem:[#allocation2]]
        %v195 = vstv %s194
        %v196 = vmul.f32 %v191, %v195
        %s197 = sld [smem:[#allocation2 + $0x1]]
        %v198 = vstv %s197
        %v199 = vmul.f32 %v192, %v198
        %v200 = vadd.f32 %v196, %v199
        %s201 = sld [smem:[#allocation2 + $0x2]]
        %v202 = vstv %s201
        %v203 = vmul.f32 %v193, %v202
        %v204 = vadd.f32 %v200, %v203
        %s205 = sld [smem:[#allocation2 + $0x3]]
        %v206 = vstv %s205
        %v207 = vadd.f32 %v204, %v206
        %v208 = vsub.f32 %v207, %v207
        %v209 = vadd.f32 %v208, 1.0
        %210 = vst [vmem:[%s190] sm:$0x3] %v209
        %s211 = sand.u32 %s91, 1
        %s212 = scalar_lea.sflag [#allocation4], %s211
        %s213 = sand.u32 %s91, 1
        %s214 = smul.addr %s213, 2
        %s215 = scalar_lea.vmem [#allocation7], %s214
        // Predicated region
        $region37: #{tpu_custom_call.1} parent=27 // pred_check
          %p216 = pneg %p101
        $region38: #{tpu_custom_call.1} parent=27 // pred_check_branch
          %218 = sbr.rel (%p216) target = $region40
        $region39: #{tpu_custom_call.1} parent=27 // pred_region
          %s220 = ssub.s32 32, 32
          %221 = vsyncadd %s212, %s220
          %s222 = sadd.s32 %s25, %s24
          %s223 = smul.addr %s222, 32
          %s224 = scalar_lea.hbm %s2, %s223
          %s226 = sshll.u32 %s215, 4
          %s227 = int_to_ptr.vmem [resolvable:$true] %s226
          %229 = dma.vmem_to_hbm [thread:$0]  %s227, 32, %s224, %s212
        $region40: #{tpu_custom_call.1} parent=27 // pred_fallthru
          _
      $region28: #{tpu_custom_call.1} parent=5 // pred_fallthru
        _
      %p230 = scmp.le.s32.totalorder 2, %s15
      // Predicated region
      $region41: #{tpu_custom_call.1} parent=5 // pred_check
        %p231 = pneg %p230
      $region42: #{tpu_custom_call.1} parent=5 // pred_check_branch
        %233 = sbr.rel (%p231) target = $region44
      $region43: #{tpu_custom_call.1} parent=5 // pred_region
        %s234 = ssub.s32 %s15, 2
        // Predicated region
        $region45: #{tpu_custom_call.1} parent=43 // pred_check
          %p235 = pneg %p107
        $region46: #{tpu_custom_call.1} parent=43 // pred_check_branch
          %237 = sbr.rel (%p235) target = $region48
        $region47: #{tpu_custom_call.1} parent=43 // pred_region
          %s238 = sand.u32 %s92, 1
          %s239 = scalar_lea.sflag [#allocation4], %s238
          %s240 = sand.u32 %s92, 1
          %s241 = smul.addr %s240, 2
          %s242 = scalar_lea.vmem [#allocation7], %s241
          %243 = dma.done %s239, 32
        $region48: #{tpu_custom_call.1} parent=43 // pred_fallthru
          _
      $region44: #{tpu_custom_call.1} parent=5 // pred_fallthru
        _
    $region6: #{tpu_custom_call.1} parent=1 // loop_footer
      %s19 = sadd.s32 1, %s15
    $region7: #{tpu_custom_call.1} parent=1 // loop_footer_branch
      %14 = sbr.rel target = $region3
    $region8: #{tpu_custom_call.1} parent=1 // loop_exit
      _
    %244 = vsyncpa [#allocation3], 1
    %s245 = scalar_lea.sflag [#allocation3], 1
    %246 = vsyncpa %s245, 1
    %247 = vsyncpa [#allocation4], 1
    %s248 = scalar_lea.sflag [#allocation4], 1
    %249 = vsyncpa %s248, 1
    %250 = vsyncpa [#allocation5], 1
    %s251 = scalar_lea.sflag [#allocation5], 1
    %252 = vsyncpa %s251, 1

</llo_original>
